<compile_context>
chip_gen: v5e
topology: v5e:2x2
jax: 0.10.0
libtpu: 0.0.40
codegen_flags: <defaults>
</compile_context>

<pallas_src>
import jax
import jax.numpy as jnp
from jax.experimental import pallas as pl
from jax.experimental.pallas import tpu as pltpu

EPS = 1e-5


def _bn_fold(gamma, beta, mean, var):
    """Fold eval-mode BatchNorm into per-channel scale/shift, shaped (C,)."""
    scale = (gamma / jnp.sqrt(var + EPS)).astype(jnp.float32)
    shift = (beta - mean * scale).astype(jnp.float32)
    return scale, shift


def _prepare_params(p):
    """Fold BN1 into conv1, BN3(+b2) into conv2; pack small vectors; weights -> bf16."""
    s1, t1 = _bn_fold(p["bn1_gamma"], p["bn1_beta"], p["bn1_mean"], p["bn1_var"])
    s2, t2 = _bn_fold(p["bn2_gamma"], p["bn2_beta"], p["bn2_mean"], p["bn2_var"])
    s3, t3 = _bn_fold(p["bn3_gamma"], p["bn3_beta"], p["bn3_mean"], p["bn3_var"])

    w1 = p["w1"].astype(jnp.float32)                      # (C_in, C_h)
    w2 = p["w2"].astype(jnp.float32)                      # (4, C_h, C_h)
    C_h = w1.shape[1]

    # BN1 folded into conv1:  (x*s1 + t1) @ w1 + b1  ==  x @ (s1[:,None]*w1) + (b1 + t1@w1)
    w1f = (w1 * s1[:, None]).astype(jnp.bfloat16)         # bf16 MXU operand
    b1f = p["b1"].astype(jnp.float32) + t1 @ w1           # (C_h,)  (folded in f32)

    # BN3 (+ conv2 bias) folded into conv2:  ((acc+b2)*s3 + t3) == acc*s3 + (b2*s3+t3)
    w2f = w2 * s3[None, None, :]                          # scale output channels
    w2cat = jnp.concatenate(
        [w2f[0], w2f[1], w2f[2], w2f[3]], axis=1).astype(jnp.bfloat16)   # (C_h, 4*C_h)
    shift3 = p["b2"].astype(jnp.float32) * s3 + t3        # (C_h,)

    # Pack the remaining per-channel vectors into one (4, 2*C_h) f32 tile (single DMA).
    zer = jnp.zeros((C_h,), jnp.float32)
    vecs = jnp.stack([
        jnp.concatenate([b1f, zer]),
        jnp.concatenate([s2, zer]),
        jnp.concatenate([t2, zer]),
        jnp.concatenate([shift3, shift3]),
    ], axis=0)                                            # (4, 2*C_h)
    return w1f, vecs, w2cat


def _decoder_kernel(x_ref, w1_ref, vec_ref, w2_ref, out_ref):
    """One grid step processes NB batch elements (batch flattened into matmul M dim).

    x_ref:   (NB, L, C_in)  f32
    w1_ref:  (C_in, C_h)    bf16 -- BN1-folded pointwise conv
    vec_ref: (4, 2*C_h)     f32  -- rows: [b1' | 0], [s2 | 0], [t2 | 0], [shift3 | shift3]
    w2_ref:  (C_h, 4*C_h)   bf16 -- BN3-folded, k-taps concatenated along output channels
    out_ref: (NB, L+2, 2*C_h) f32 -- lanes [:C_h] = even positions 2m, lanes [C_h:] = odd 2m+1
    """
    NB, L, C_in = x_ref.shape
    C_h = w1_ref.shape[1]
    C2 = 2 * C_h

    x = x_ref[...].reshape(NB * L, C_in).astype(jnp.bfloat16)   # flatten batch into M
    vecs = vec_ref[...]
    b1 = vecs[0:1, :C_h]
    s2 = vecs[1:2, :C_h]
    t2 = vecs[2:3, :C_h]
    shift3 = vecs[3:4, :].reshape(1, 1, C2)               # (1, 1, 2*C_h)

    # conv1 (BN1 pre-folded) -> residual(BN2, ReLU) -> ReLU.  bf16 operands, f32 accum.
    h = jnp.dot(x, w1_ref[...], preferred_element_type=jnp.float32) + b1
    h = h + jnp.maximum(h * s2 + t2, 0.0)
    r = jnp.maximum(h, 0.0).astype(jnp.bfloat16)          # (NB*L, C_h)

    # ConvTranspose1d(k=4, s=2): one 256-lane matmul; y[:, k*C_h:(k+1)*C_h] = r @ W2[k]
    y = jnp.dot(r, w2_ref[...], preferred_element_type=jnp.float32)     # (NB*L, 4*C_h)
    y = y.reshape(NB, L, 4 * C_h)
    y_lo = y[:, :, :C2]                                   # contributes to packed row m
    y_hi = y[:, :, C2:]                                   # contributes to packed row m+1

    # Single-pass output assembly: overlap sum computed in vregs, one store per row-region
    # (no zero-init, no read-modify-write over out_ref).  Packed rows:
    #   even(2m) = y0[m] + y2[m-1],  odd(2m+1) = y1[m] + y3[m-1],  m = 0..L+1.
    out_ref[:, 0:1, :] = jnp.maximum(y_lo[:, 0:1, :] + shift3, 0.0)                    # row 0
    out_ref[:, 1:L, :] = jnp.maximum(
        y_lo[:, 1:L, :] + y_hi[:, 0:L - 1, :] + shift3, 0.0)                           # rows 1..L-1
    out_ref[:, L:L + 1, :] = jnp.maximum(y_hi[:, L - 1:L, :] + shift3, 0.0)            # row L
    out_ref[:, L + 1:L + 2, :] = jnp.broadcast_to(
        jnp.maximum(shift3, 0.0), (NB, 1, C2))                                         # tail row


def _pick_batch_block(N, L, target_rows=512):
    """Largest divisor NB of N with NB*L <= target_rows, shrunk so the grid has >= 2 steps
    whenever N >= 2 (pipelining / both v7x TensorCores)."""
    best = 1
    for nb in range(1, N + 1):
        if N % nb == 0 and nb * L <= target_rows:
            best = nb
    while best > 1 and N // best < 2:
        nb = best - 1
        while nb >= 1 and N % nb != 0:
            nb -= 1
        best = max(nb, 1)
    return best


def decoder_forward(x_ncl, p, *, batch_block=None):
    """x_ncl: (N, C_in, L) float32 (PyTorch NCL).  Returns (N, C_h, 2L+3)."""
    x = jnp.transpose(x_ncl, (0, 2, 1)).astype(jnp.float32)          # (N, L, C_in)
    N, L, C_in = x.shape
    assert L >= 2
    C_h = p["w1"].shape[1]
    C2 = 2 * C_h
    Lp2 = L + 2

    NB = batch_block if batch_block is not None else _pick_batch_block(N, L)
    assert N % NB == 0
    grid = (N // NB,)

    w1f, vecs, w2cat = _prepare_params(p)

    packed = pl.pallas_call(
        _decoder_kernel,
        grid=grid,
        in_specs=[
            pl.BlockSpec((NB, L, C_in), lambda g: (g, 0, 0)),        # x (pipelined)
            pl.BlockSpec((C_in, C_h), lambda g: (0, 0)),             # w1 bf16 (resident)
            pl.BlockSpec((4, C2), lambda g: (0, 0)),                 # packed vectors
            pl.BlockSpec((C_h, 4 * C_h), lambda g: (0, 0)),          # w2cat bf16 (resident)
        ],
        out_specs=pl.BlockSpec((NB, Lp2, C2), lambda g: (g, 0, 0)),
        out_shape=jax.ShapeDtypeStruct((N, Lp2, C2), jnp.float32),
        compiler_params=pltpu.CompilerParams(
            dimension_semantics=("parallel",),
            vmem_limit_bytes=48 * 1024 * 1024,
        ),
    )(x, w1f, vecs, w2cat)

    # Interleave even/odd lane-halves (free contiguous reshape), drop the one
    # out-of-range row (position 2L+3), back to PyTorch NCL.
    out = packed.reshape(N, 2 * Lp2, C_h)[:, : 2 * L + 3, :]
    return jnp.transpose(out, (0, 2, 1))


def reference_forward(x_ncl, p):
    """Pure-JAX f32 reference (independent, unfolded decomposition)."""
    x = jnp.transpose(x_ncl, (0, 2, 1)).astype(jnp.float32)
    s1, t1 = _bn_fold(p["bn1_gamma"], p["bn1_beta"], p["bn1_mean"], p["bn1_var"])
    s2, t2 = _bn_fold(p["bn2_gamma"], p["bn2_beta"], p["bn2_mean"], p["bn2_var"])
    s3, t3 = _bn_fold(p["bn3_gamma"], p["bn3_beta"], p["bn3_mean"], p["bn3_var"])

    xn = x * s1 + t1
    h = jnp.einsum("nlc,cd->nld", xn, p["w1"]) + p["b1"]
    h = h + jnp.maximum(h * s2 + t2, 0.0)
    r = jnp.maximum(h, 0.0)

    N, L, C_h = r.shape
    Lout = (L - 1) * 2 + 4 + 1                                       # + output_padding
    out = jnp.zeros((N, Lout, C_h), jnp.float32)
    for l in range(L):
        for k in range(4):
            out = out.at[:, 2 * l + k, :].add(r[:, l, :] @ p["w2"][k])
    out = out + p["b2"]
    out = jnp.maximum(out * s3 + t3, 0.0)
    return jnp.transpose(out, (0, 2, 1))


def init_params(key, c_in, c_h):
    ks = jax.random.split(key, 16)
    u = lambda k, s: jax.random.uniform(k, s, jnp.float32, 0.5, 1.5)
    n = lambda k, s, sc: jax.random.normal(k, s, jnp.float32) * sc
    p = {}
    p["bn1_gamma"], p["bn1_beta"] = u(ks[0], (c_in,)), n(ks[1], (c_in,), 0.1)
    p["bn1_mean"], p["bn1_var"] = n(ks[2], (c_in,), 0.1), u(ks[3], (c_in,))
    # ConvTranspose1d(c_in, c_h, 1, 1): torch weight (c_in, c_h, 1) -> (c_in, c_h)
    p["w1"] = n(ks[4], (c_in, c_h), 1.0 / (c_in ** 0.5))
    p["b1"] = n(ks[5], (c_h,), 0.05)
    p["bn2_gamma"], p["bn2_beta"] = u(ks[6], (c_h,)), n(ks[7], (c_h,), 0.1)
    p["bn2_mean"], p["bn2_var"] = n(ks[8], (c_h,), 0.1), u(ks[9], (c_h,))
    # ConvTranspose1d(c_h, c_h, 4, 2, 0, 1): torch weight (c_h, c_h, 4) stored as (4, c_h, c_h)
    p["w2"] = n(ks[10], (4, c_h, c_h), 1.0 / ((4 * c_h) ** 0.5))
    p["b2"] = n(ks[11], (c_h,), 0.05)
    p["bn3_gamma"], p["bn3_beta"] = u(ks[12], (c_h,)), n(ks[13], (c_h,), 0.1)
    p["bn3_mean"], p["bn3_var"] = n(ks[14], (c_h,), 0.1), u(ks[15], (c_h,))
    return p


if __name__ == "__main__":
    # Small shapes consistent with the module (channels parameterized down from 1024).
    N, C_in, C_h, L = 2, 32, 64, 8
    key = jax.random.PRNGKey(0)
    kx, kp = jax.random.split(key)
    x = jax.random.normal(kx, (N, C_in, L), dtype=jnp.float32)       # PyTorch NCL input
    params = init_params(kp, C_in, C_h)

    out = decoder_forward(x, params)
    out = jax.block_until_ready(out)

    ref = reference_forward(x, params)
    assert out.shape == (N, C_h, 2 * L + 3), out.shape
    # bf16 matmul operands (f32 accumulation) -> loosened tolerance vs the f32 reference.
    assert jnp.allclose(out, ref, atol=5e-2, rtol=5e-2), float(jnp.max(jnp.abs(out - ref)))
    print("KERNEL_OK")
</pallas_src>

<mosaic_0001>
module attributes {stable_mosaic.version = 11 : i64} {
  func.func @_decoder_kernel(%arg0: i32, %arg1: memref<1x8x32xf32, #tpu.memory_space<vmem>>, %arg2: memref<32x64xbf16, #tpu.memory_space<vmem>>, %arg3: memref<4x128xf32, #tpu.memory_space<vmem>>, %arg4: memref<64x256xbf16, #tpu.memory_space<vmem>>, %arg5: memref<1x10x128xf32, #tpu.memory_space<vmem>>) attributes {dimension_semantics = [#tpu.dimension_semantics<parallel>], iteration_bounds = array<i64: 2>, scalar_prefetch = 0 : i64, scratch_operands = 0 : i64, tpu.core_type = #tpu.core_type<tc>, window_params = [{transform_indices = @transform_0, window_bounds = array<i64: 1, 8, 32>}, {pipeline_mode = #tpu.pipeline_mode<synchronous>, transform_indices = @transform_1, window_bounds = array<i64: 32, 64>}, {pipeline_mode = #tpu.pipeline_mode<synchronous>, transform_indices = @transform_2, window_bounds = array<i64: 4, 128>}, {pipeline_mode = #tpu.pipeline_mode<synchronous>, transform_indices = @transform_3, window_bounds = array<i64: 64, 256>}, {transform_indices = @transform_4, window_bounds = array<i64: 1, 10, 128>}]} {
    %c0 = arith.constant 0 : index
    %c0_0 = arith.constant 0 : index
    %c0_1 = arith.constant 0 : index
    %0 = vector.load %arg1[%c0, %c0_0, %c0_1] : memref<1x8x32xf32, #tpu.memory_space<vmem>>, vector<1x8x32xf32>
    %1 = vector.shape_cast %0 : vector<1x8x32xf32> to vector<8x32xf32>
    %2 = arith.truncf %1 : vector<8x32xf32> to vector<8x32xbf16>
    %c0_2 = arith.constant 0 : index
    %c0_3 = arith.constant 0 : index
    %3 = vector.load %arg3[%c0_2, %c0_3] : memref<4x128xf32, #tpu.memory_space<vmem>>, vector<4x128xf32>
    %4 = vector.extract_strided_slice %3 {offsets = [0, 0], sizes = [1, 64], strides = [1, 1]} : vector<4x128xf32> to vector<1x64xf32>
    %5 = vector.extract_strided_slice %3 {offsets = [1, 0], sizes = [1, 64], strides = [1, 1]} : vector<4x128xf32> to vector<1x64xf32>
    %6 = vector.extract_strided_slice %3 {offsets = [2, 0], sizes = [1, 64], strides = [1, 1]} : vector<4x128xf32> to vector<1x64xf32>
    %7 = vector.extract_strided_slice %3 {offsets = [3, 0], sizes = [1, 128], strides = [1, 1]} : vector<4x128xf32> to vector<1x128xf32>
    %8 = vector.shape_cast %7 : vector<1x128xf32> to vector<1x1x128xf32>
    %c0_4 = arith.constant 0 : index
    %c0_5 = arith.constant 0 : index
    %9 = vector.load %arg2[%c0_4, %c0_5] : memref<32x64xbf16, #tpu.memory_space<vmem>>, vector<32x64xbf16>
    %cst = arith.constant dense<0.000000e+00> : vector<8x64xf32>
    %10 = tpu.matmul %2, %9, %cst {dimension_numbers = #tpu.dot_dimension_numbers<[1], [0], [0], [1], [0, 0, 1, 1], [], []>} : vector<8x32xbf16>, vector<32x64xbf16>, vector<8x64xf32> -> vector<8x64xf32>
    %11 = vector.broadcast %4 : vector<1x64xf32> to vector<8x64xf32>
    %12 = arith.addf %10, %11 : vector<8x64xf32>
    %13 = vector.broadcast %5 : vector<1x64xf32> to vector<8x64xf32>
    %14 = arith.mulf %12, %13 : vector<8x64xf32>
    %15 = vector.broadcast %6 : vector<1x64xf32> to vector<8x64xf32>
    %16 = arith.addf %14, %15 : vector<8x64xf32>
    %cst_6 = arith.constant 0.000000e+00 : f32
    %17 = vector.broadcast %cst_6 : f32 to vector<8x64xf32>
    %18 = arith.maximumf %16, %17 : vector<8x64xf32>
    %19 = arith.addf %12, %18 : vector<8x64xf32>
    %cst_7 = arith.constant 0.000000e+00 : f32
    %20 = vector.broadcast %cst_7 : f32 to vector<8x64xf32>
    %21 = arith.maximumf %19, %20 : vector<8x64xf32>
    %22 = arith.truncf %21 : vector<8x64xf32> to vector<8x64xbf16>
    %c0_8 = arith.constant 0 : index
    %c0_9 = arith.constant 0 : index
    %23 = vector.load %arg4[%c0_8, %c0_9] : memref<64x256xbf16, #tpu.memory_space<vmem>>, vector<64x256xbf16>
    %cst_10 = arith.constant dense<0.000000e+00> : vector<8x256xf32>
    %24 = tpu.matmul %22, %23, %cst_10 {dimension_numbers = #tpu.dot_dimension_numbers<[1], [0], [0], [1], [0, 0, 1, 1], [], []>} : vector<8x64xbf16>, vector<64x256xbf16>, vector<8x256xf32> -> vector<8x256xf32>
    %25 = vector.shape_cast %24 : vector<8x256xf32> to vector<1x8x256xf32>
    %26 = vector.extract_strided_slice %25 {offsets = [0, 0, 0], sizes = [1, 8, 128], strides = [1, 1, 1]} : vector<1x8x256xf32> to vector<1x8x128xf32>
    %27 = vector.extract_strided_slice %25 {offsets = [0, 0, 128], sizes = [1, 8, 128], strides = [1, 1, 1]} : vector<1x8x256xf32> to vector<1x8x128xf32>
    %28 = vector.extract_strided_slice %26 {offsets = [0, 0, 0], sizes = [1, 1, 128], strides = [1, 1, 1]} : vector<1x8x128xf32> to vector<1x1x128xf32>
    %29 = arith.addf %28, %8 : vector<1x1x128xf32>
    %cst_11 = arith.constant 0.000000e+00 : f32
    %30 = vector.broadcast %cst_11 : f32 to vector<1x1x128xf32>
    %31 = arith.maximumf %29, %30 : vector<1x1x128xf32>
    %c0_12 = arith.constant 0 : index
    %c0_13 = arith.constant 0 : index
    %c0_14 = arith.constant 0 : index
    %32 = vector.load %arg5[%c0_12, %c0_13, %c0_14] : memref<1x10x128xf32, #tpu.memory_space<vmem>>, vector<1x1x128xf32>
    tpu.vector_store %arg5[%c0_12, %c0_13, %c0_14], %31 {strides = array<i32>} : memref<1x10x128xf32, #tpu.memory_space<vmem>>, vector<1x1x128xf32>,
    %33 = vector.extract_strided_slice %26 {offsets = [0, 1, 0], sizes = [1, 7, 128], strides = [1, 1, 1]} : vector<1x8x128xf32> to vector<1x7x128xf32>
    %34 = vector.extract_strided_slice %27 {offsets = [0, 0, 0], sizes = [1, 7, 128], strides = [1, 1, 1]} : vector<1x8x128xf32> to vector<1x7x128xf32>
    %35 = arith.addf %33, %34 : vector<1x7x128xf32>
    %36 = vector.broadcast %8 : vector<1x1x128xf32> to vector<1x7x128xf32>
    %37 = arith.addf %35, %36 : vector<1x7x128xf32>
    %cst_15 = arith.constant 0.000000e+00 : f32
    %38 = vector.broadcast %cst_15 : f32 to vector<1x7x128xf32>
    %39 = arith.maximumf %37, %38 : vector<1x7x128xf32>
    %c0_16 = arith.constant 0 : index
    %c1 = arith.constant 1 : index
    %c0_17 = arith.constant 0 : index
    %40 = vector.load %arg5[%c0_16, %c1, %c0_17] : memref<1x10x128xf32, #tpu.memory_space<vmem>>, vector<1x7x128xf32>
    tpu.vector_store %arg5[%c0_16, %c1, %c0_17], %39 {strides = array<i32>} : memref<1x10x128xf32, #tpu.memory_space<vmem>>, vector<1x7x128xf32>,
    %41 = vector.extract_strided_slice %27 {offsets = [0, 7, 0], sizes = [1, 1, 128], strides = [1, 1, 1]} : vector<1x8x128xf32> to vector<1x1x128xf32>
    %42 = arith.addf %41, %8 : vector<1x1x128xf32>
    %cst_18 = arith.constant 0.000000e+00 : f32
    %43 = vector.broadcast %cst_18 : f32 to vector<1x1x128xf32>
    %44 = arith.maximumf %42, %43 : vector<1x1x128xf32>
    %c0_19 = arith.constant 0 : index
    %c8 = arith.constant 8 : index
    %c0_20 = arith.constant 0 : index
    %45 = vector.load %arg5[%c0_19, %c8, %c0_20] : memref<1x10x128xf32, #tpu.memory_space<vmem>>, vector<1x1x128xf32>
    tpu.vector_store %arg5[%c0_19, %c8, %c0_20], %44 {strides = array<i32>} : memref<1x10x128xf32, #tpu.memory_space<vmem>>, vector<1x1x128xf32>,
    %cst_21 = arith.constant 0.000000e+00 : f32
    %46 = vector.broadcast %cst_21 : f32 to vector<1x1x128xf32>
    %47 = arith.maximumf %8, %46 : vector<1x1x128xf32>
    %c0_22 = arith.constant 0 : index
    %c9 = arith.constant 9 : index
    %c0_23 = arith.constant 0 : index
    %48 = vector.load %arg5[%c0_22, %c9, %c0_23] : memref<1x10x128xf32, #tpu.memory_space<vmem>>, vector<1x1x128xf32>
    tpu.vector_store %arg5[%c0_22, %c9, %c0_23], %47 {strides = array<i32>} : memref<1x10x128xf32, #tpu.memory_space<vmem>>, vector<1x1x128xf32>,
    return
  }
  func.func @transform_0(%arg0: i32) -> (i32, i32, i32) {
    %c0_i32 = arith.constant 0 : i32
    %c0_i32_0 = arith.constant 0 : i32
    %c0_i32_1 = arith.constant 0 : i32
    return %arg0, %c0_i32, %c0_i32_0 : i32, i32, i32
  }
  func.func @transform_1(%arg0: i32) -> (i32, i32) {
    %c0_i32 = arith.constant 0 : i32
    %c0_i32_0 = arith.constant 0 : i32
    %c0_i32_1 = arith.constant 0 : i32
    return %c0_i32, %c0_i32_0 : i32, i32
  }
  func.func @transform_2(%arg0: i32) -> (i32, i32) {
    %c0_i32 = arith.constant 0 : i32
    %c0_i32_0 = arith.constant 0 : i32
    %c0_i32_1 = arith.constant 0 : i32
    return %c0_i32, %c0_i32_0 : i32, i32
  }
  func.func @transform_3(%arg0: i32) -> (i32, i32) {
    %c0_i32 = arith.constant 0 : i32
    %c0_i32_0 = arith.constant 0 : i32
    %c0_i32_1 = arith.constant 0 : i32
    return %c0_i32, %c0_i32_0 : i32, i32
  }
  func.func @transform_4(%arg0: i32) -> (i32, i32, i32) {
    %c0_i32 = arith.constant 0 : i32
    %c0_i32_0 = arith.constant 0 : i32
    %c0_i32_1 = arith.constant 0 : i32
    return %arg0, %c0_i32, %c0_i32_0 : i32, i32, i32
  }
}

</mosaic_0001>

<llo_original>
// kernel: tpu_custom_call.1
$region0: #{tpu_custom_call.1}
  #allocation0 [shape = 'u32[]', space=smem, size = 0x4, offset = 0x4, fixed_abs, tag = 'smem constant byte address 0x4 - core index']
  #allocation1 [shape = 'u32[72,128]{1,0:T(1,128)}', space=vmem, size = 0x9000, scoped, tag = 'internal scratch']
  %s0 = inlined_call_operand.hbm [shape: f32[2,8,32], index: 0, kind: input, shape index: {}]
  %s1 = inlined_call_operand.hbm [shape: bf16[32,64], index: 1, kind: input, shape index: {}]
  %s2 = inlined_call_operand.hbm [shape: f32[4,128], index: 2, kind: input, shape index: {}]
  %s3 = inlined_call_operand.hbm [shape: bf16[64,256], index: 3, kind: input, shape index: {}]
  %s4 = inlined_call_operand.vmem [shape: f32[2,10,128], index: 4, kind: output, shape index: {}]
  %s5 = sld [smem:[#allocation0]]
  $region65: #{tpu_custom_call.1} parent=0
    _
  %s7 = ssub.s32 1, %s5
  %s8 = scalar_select 0, %s7, %s5
  $region1: #{tpu_custom_call.1} parent=0
    #allocation2 [shape = 'u8[8192]{0}', space=vmem, size = 0x2000, scoped, tag = 'input window, operand 0']
    #allocation3 [shape = 's32[2]{0}', space=sflag, size = 0x8, scoped, tag = 'scoped memory for tpu_custom_call.1']
    #allocation4 [shape = 'u8[8192]{0}', space=vmem, size = 0x2000, scoped, tag = 'input window, operand 1, single buffered']
    #allocation5 [shape = 's32[1]{0}', space=sflag, size = 0x4, scoped, tag = 'scoped memory for tpu_custom_call.1']
    #allocation6 [shape = 'u8[2048]{0}', space=vmem, size = 0x800, scoped, tag = 'input window, operand 2, single buffered']
    #allocation7 [shape = 'u8[32768]{0}', space=vmem, size = 0x8000, scoped, tag = 'input window, operand 3, single buffered']
    #allocation8 [shape = 's32[1]{0}', space=sflag, size = 0x4, scoped, tag = 'scoped memory for tpu_custom_call.1']
    %9 = vsyncpa [#allocation3], 0
    %s10 = scalar_lea.sflag [#allocation3], 1
    %11 = vsyncpa %s10, 0
    %12 = vsyncpa [#allocation5], 0
    %13 = vsyncpa [#allocation8], 0
    loop: start=0, step=1, limit=4
    $region2: #{tpu_custom_call.1} parent=1 // loop_pre_header
      _
    $region3: #{tpu_custom_call.1} parent=1 // loop_header
      %s15 = sphi 0, %s19
      %p16 = scmp.ge.s32.totalorder %s15, 4
      %s25 = sphi 0, %s27
      %s28 = sphi 0, %s25
      %s29 = sphi 0, %s28
      %s45 = sphi 0, %s29
      %s49 = sphi 0, %s49
      %s51 = sphi 0, %s49
      %s52 = sphi 0, %s51
      %s66 = sphi 0, %s52
      %s70 = sphi 0, %s70
      %s72 = sphi 0, %s70
      %s73 = sphi 0, %s72
      %s87 = sphi 0, %s73
      %s91 = sphi 0, %s91
      %s93 = sphi 0, %s91
      %s94 = sphi 0, %s93
      %s108 = sphi 0, %s94
      %s114 = sphi 0, %s116
      %s117 = sphi 0, %s114
      %s118 = sphi 0, %s117
      %s134 = sphi 0, %s118
    $region4: #{tpu_custom_call.1} parent=1 // loop_header_branch
      %18 = sbr.rel (%p16) target = $region8
    $region5: #{tpu_custom_call.1} parent=1 // loop_body
      %s20 = ssub.s32 %s15, 1
      %s21 = ssub.s32 %s15, 2
      %s22 = sadd.s32 %s15, 1
      %s23 = ssub.s32 %s15, %s22
      %p24 = scmp.eq.s32.totalorder %s23, 0
      %s26 = sadd.s32 %s25, 1
      %s27 = scalar_select %p24, %s25, %s26
      %p30 = pneg %p24
      %p31 = scmp.eq.s32.totalorder %s15, 1
      %p32 = por %p30, %p31
      %p33 = scmp.ne.s32.totalorder %s25, %s28
      %p34 = scmp.eq.s32.totalorder %s15, 0
      %p35 = por %p33, %p34
      %p36 = scmp.ne.s32.totalorder %s25, %s28
      %p37 = scmp.eq.s32.totalorder %s20, 1
      %p38 = por %p36, %p37
      %p39 = scmp.ne.s32.totalorder %s28, %s29
      %p40 = scmp.eq.s32.totalorder %s20, 0
      %p41 = por %p39, %p40
      %p42 = scmp.ne.s32.totalorder %s28, %s29
      %p43 = scmp.eq.s32.totalorder %s21, 1
      %p44 = por %p42, %p43
      %p46 = scmp.ne.s32.totalorder %s29, %s45
      %p47 = scmp.eq.s32.totalorder %s21, 0
      %p48 = por %p46, %p47
      %s50 = sadd.s32 %s49, 1
      %p53 = scmp.eq.s32.totalorder %s15, 1
      %p54 = scmp.ne.s32.totalorder %s49, %s51
      %p55 = scmp.eq.s32.totalorder %s15, 0
      %p56 = por %p54, %p55
      %p57 = scmp.ne.s32.totalorder %s49, %s51
      %p58 = scmp.eq.s32.totalorder %s20, 1
      %p59 = por %p57, %p58
      %p60 = scmp.ne.s32.totalorder %s51, %s52
      %p61 = scmp.eq.s32.totalorder %s20, 0
      %p62 = por %p60, %p61
      %p63 = scmp.ne.s32.totalorder %s51, %s52
      %p64 = scmp.eq.s32.totalorder %s21, 1
      %p65 = por %p63, %p64
      %p67 = scmp.ne.s32.totalorder %s52, %s66
      %p68 = scmp.eq.s32.totalorder %s21, 0
      %p69 = por %p67, %p68
      %s71 = sadd.s32 %s70, 1
      %p74 = scmp.eq.s32.totalorder %s15, 1
      %p75 = scmp.ne.s32.totalorder %s70, %s72
      %p76 = scmp.eq.s32.totalorder %s15, 0
      %p77 = por %p75, %p76
      %p78 = scmp.ne.s32.totalorder %s70, %s72
      %p79 = scmp.eq.s32.totalorder %s20, 1
      %p80 = por %p78, %p79
      %p81 = scmp.ne.s32.totalorder %s72, %s73
      %p82 = scmp.eq.s32.totalorder %s20, 0
      %p83 = por %p81, %p82
      %p84 = scmp.ne.s32.totalorder %s72, %s73
      %p85 = scmp.eq.s32.totalorder %s21, 1
      %p86 = por %p84, %p85
      %p88 = scmp.ne.s32.totalorder %s73, %s87
      %p89 = scmp.eq.s32.totalorder %s21, 0
      %p90 = por %p88, %p89
      %s92 = sadd.s32 %s91, 1
      %p95 = scmp.eq.s32.totalorder %s15, 1
      %p96 = scmp.ne.s32.totalorder %s91, %s93
      %p97 = scmp.eq.s32.totalorder %s15, 0
      %p98 = por %p96, %p97
      %p99 = scmp.ne.s32.totalorder %s91, %s93
      %p100 = scmp.eq.s32.totalorder %s20, 1
      %p101 = por %p99, %p100
      %p102 = scmp.ne.s32.totalorder %s93, %s94
      %p103 = scmp.eq.s32.totalorder %s20, 0
      %p104 = por %p102, %p103
      %p105 = scmp.ne.s32.totalorder %s93, %s94
      %p106 = scmp.eq.s32.totalorder %s21, 1
      %p107 = por %p105, %p106
      %p109 = scmp.ne.s32.totalorder %s94, %s108
      %p110 = scmp.eq.s32.totalorder %s21, 0
      %p111 = por %p109, %p110
      %s112 = ssub.s32 %s15, %s22
      %p113 = scmp.eq.s32.totalorder %s112, 0
      %s115 = sadd.s32 %s114, 1
      %s116 = scalar_select %p113, %s114, %s115
      %p119 = pneg %p113
      %p120 = scmp.eq.s32.totalorder %s15, 1
      %p121 = por %p119, %p120
      %p122 = scmp.ne.s32.totalorder %s114, %s117
      %p123 = scmp.eq.s32.totalorder %s15, 0
      %p124 = por %p122, %p123
      %p125 = scmp.ne.s32.totalorder %s114, %s117
      %p126 = scmp.eq.s32.totalorder %s20, 1
      %p127 = por %p125, %p126
      %p128 = scmp.ne.s32.totalorder %s117, %s118
      %p129 = scmp.eq.s32.totalorder %s20, 0
      %p130 = por %p128, %p129
      %p131 = scmp.ne.s32.totalorder %s117, %s118
      %p132 = scmp.eq.s32.totalorder %s21, 1
      %p133 = por %p131, %p132
      %p135 = scmp.ne.s32.totalorder %s118, %s134
      %p136 = scmp.eq.s32.totalorder %s21, 0
      %p137 = por %p135, %p136
      %p138 = scmp.le.s32.totalorder 1, %s15
      %p139 = scmp.lt.s32.totalorder %s15, 3
      %p140 = pnand %p138, %p139
      %p141 = pneg %p140
      // Predicated region
      $region9: #{tpu_custom_call.1} parent=5 // pred_check
        _
      $region10: #{tpu_custom_call.1} parent=5 // pred_check_branch
        %143 = sbr.rel (%p140) target = $region12
      $region11: #{tpu_custom_call.1} parent=5 // pred_region
        %s144 = ssub.s32 %s15, 1
        // Predicated region
        $region13: #{tpu_custom_call.1} parent=11 // pred_check
          %p145 = pneg %p62
        $region14: #{tpu_custom_call.1} parent=11 // pred_check_branch
          %147 = sbr.rel (%p145) target = $region16
        $region15: #{tpu_custom_call.1} parent=11 // pred_region
          %149 = vsyncadd [#allocation5], 0
          %s150 = sshll.u32 %s1, 4
          %s151 = int_to_ptr.hbm [resolvable:$true] %s150
          %s152 = sshll.u32 [#allocation4], 4
          %s153 = int_to_ptr.vmem [resolvable:$true] %s152
          %158 = dma.hbm_to_vmem [thread:$0]  %s151, 256, %s153, [#allocation5], 64, 64, 4
        $region16: #{tpu_custom_call.1} parent=11 // pred_fallthru
          _
        // Predicated region
        $region17: #{tpu_custom_call.1} parent=11 // pred_check
          %p159 = pneg %p83
        $region18: #{tpu_custom_call.1} parent=11 // pred_check_branch
          %161 = sbr.rel (%p159) target = $region20
        $region19: #{tpu_custom_call.1} parent=11 // pred_region
          %163 = vsyncadd [#allocation5], 0
          %s165 = sshll.u32 %s2, 4
          %s166 = int_to_ptr.hbm [resolvable:$true] %s165
          %s167 = sshll.u32 [#allocation6], 4
          %s168 = int_to_ptr.vmem [resolvable:$true] %s167
          %170 = dma.hbm_to_vmem [thread:$0]  %s166, 64, %s168, [#allocation5]
        $region20: #{tpu_custom_call.1} parent=11 // pred_fallthru
          _
        // Predicated region
        $region21: #{tpu_custom_call.1} parent=11 // pred_check
          %p171 = pneg %p104
        $region22: #{tpu_custom_call.1} parent=11 // pred_check_branch
          %173 = sbr.rel (%p171) target = $region24
        $region23: #{tpu_custom_call.1} parent=11 // pred_region
          %175 = vsyncadd [#allocation8], 0
          %s176 = sshll.u32 %s3, 4
          %s177 = int_to_ptr.hbm [resolvable:$true] %s176
          %s178 = sshll.u32 [#allocation7], 4
          %s179 = int_to_ptr.vmem [resolvable:$true] %s178
          %184 = dma.hbm_to_vmem [thread:$0]  %s177, 1024, %s179, [#allocation8], 128, 128, 8
        $region24: #{tpu_custom_call.1} parent=11 // pred_fallthru
          _
      $region12: #{tpu_custom_call.1} parent=5 // pred_fallthru
        _
      %p185 = scmp.lt.s32.totalorder %s15, 2
      // Predicated region
      $region25: #{tpu_custom_call.1} parent=5 // pred_check
        %p186 = pneg %p185
      $region26: #{tpu_custom_call.1} parent=5 // pred_check_branch
        %188 = sbr.rel (%p186) target = $region28
      $region27: #{tpu_custom_call.1} parent=5 // pred_region
        // Predicated region
        $region29: #{tpu_custom_call.1} parent=27 // pred_check
          %p189 = pneg %p35
        $region30: #{tpu_custom_call.1} parent=27 // pred_check_branch
          %191 = sbr.rel (%p189) target = $region32
        $region31: #{tpu_custom_call.1} parent=27 // pred_region
          %s192 = sand.u32 %s25, 1
          %s193 = scalar_lea.sflag [#allocation3], %s192
          %s194 = sand.u32 %s25, 1
          %s195 = smul.addr %s194, 8
          %s196 = scalar_lea.vmem [#allocation2], %s195
          %198 = vsyncadd %s193, 0
          %s199 = smul.addr %s15, 8
          %s200 = scalar_lea.hbm %s0, %s199
          %s202 = sshll.u32 %s200, 4
          %s203 = int_to_ptr.hbm [resolvable:$true] %s202
          %s204 = sshll.u32 %s196, 4
          %s205 = int_to_ptr.vmem [resolvable:$true] %s204
          %207 = dma.hbm_to_vmem [thread:$0]  %s203, 128, %s205, %s193
        $region32: #{tpu_custom_call.1} parent=27 // pred_fallthru
          _
      $region28: #{tpu_custom_call.1} parent=5 // pred_fallthru
        _
      %p208 = scmp.le.s32.totalorder 1, %s15
      %p209 = scmp.lt.s32.totalorder %s15, 3
      %p210 = pnand %p208, %p209
      %p211 = pneg %p210
      // Predicated region
      $region33: #{tpu_custom_call.1} parent=5 // pred_check
        _
      $region34: #{tpu_custom_call.1} parent=5 // pred_check_branch
        %213 = sbr.rel (%p210) target = $region36
      $region35: #{tpu_custom_call.1} parent=5 // pred_region
        %s214 = ssub.s32 %s15, 1
        %s215 = sand.u32 %s28, 1
        %s216 = scalar_lea.sflag [#allocation3], %s215
        %s217 = sand.u32 %s28, 1
        %s218 = smul.addr %s217, 8
        %s219 = scalar_lea.vmem [#allocation2], %s218
        // Predicated region
        $region37: #{tpu_custom_call.1} parent=35 // pred_check
          %p220 = pneg %p41
        $region38: #{tpu_custom_call.1} parent=35 // pred_check_branch
          %222 = sbr.rel (%p220) target = $region40
        $region39: #{tpu_custom_call.1} parent=35 // pred_region
          %224 = dma.done %s216, 128
        $region40: #{tpu_custom_call.1} parent=35 // pred_fallthru
          _
        // Predicated region
        $region41: #{tpu_custom_call.1} parent=35 // pred_check
          %p225 = pneg %p62
        $region42: #{tpu_custom_call.1} parent=35 // pred_check_branch
          %227 = sbr.rel (%p225) target = $region44
        $region43: #{tpu_custom_call.1} parent=35 // pred_region
          %229 = dma.done [#allocation5], 256
        $region44: #{tpu_custom_call.1} parent=35 // pred_fallthru
          _
        // Predicated region
        $region45: #{tpu_custom_call.1} parent=35 // pred_check
          %p230 = pneg %p83
        $region46: #{tpu_custom_call.1} parent=35 // pred_check_branch
          %232 = sbr.rel (%p230) target = $region48
        $region47: #{tpu_custom_call.1} parent=35 // pred_region
          %234 = dma.done [#allocation5], 64
        $region48: #{tpu_custom_call.1} parent=35 // pred_fallthru
          _
        // Predicated region
        $region49: #{tpu_custom_call.1} parent=35 // pred_check
          %p235 = pneg %p104
        $region50: #{tpu_custom_call.1} parent=35 // pred_check_branch
          %237 = sbr.rel (%p235) target = $region52
        $region51: #{tpu_custom_call.1} parent=35 // pred_region
          %239 = dma.done [#allocation8], 1024
        $region52: #{tpu_custom_call.1} parent=35 // pred_fallthru
          _
        %s240 = sand.u32 %s28, 1
        %s241 = scalar_lea.sflag [#allocation3], %s240
        %s242 = sand.u32 %s28, 1
        %s243 = smul.addr %s242, 8
        %s244 = scalar_lea.vmem [#allocation2], %s243
        %p245 = pneg %p41
        %p246 = pneg %p38
        %p247 = pneg %p62
        %p248 = pneg %p59
        %p249 = pneg %p83
        %p250 = pneg %p80
        %p251 = pneg %p104
        %p252 = pneg %p101
        %p253 = pneg %p130
        %p254 = pneg %p127
        %p255 = scmp.lt.s32.totalorder %s20, 1
        %s256 = scalar_select %p255, %s20, 1
        %s257 = smul.addr %s256, 2
        %s258 = smul.addr %s257, 8
        %s259 = scalar_lea.vmem %s4, %s258
        %p260 = scmp.lt.s32.totalorder %s20, 1
        %s261 = scalar_select %p260, %s20, 1
        %s262 = smul.addr %s261, 2
        %s263 = smul.addr %s262, 8
        %s264 = scalar_lea.vmem %s4, %s263
        %v266 = vld [vmem:[%s219] sm:$0xff]
        %v267 = vpack.c.bf16 %v266, %v266
        %v268 = vld [vmem:[#allocation6] sm:$0xf]
        %v269 = vld [vmem:[#allocation4] sm:$0xf]
        %v270 = vld [vmem:[#allocation4 + $0x4] sm:$0xf]
        %v271 = vld [vmem:[#allocation4 + $0x8] sm:$0xf]
        %v272 = vld [vmem:[#allocation4 + $0xc] sm:$0xf]
        %v273 = vperm.slane %v268, 0
        %v278 = vunpack.c.l.b16 %v269
        %v279 = vunpack.c.l.b16 %v270
        %v280 = vunpack.c.l.b16 %v271
        %v281 = vunpack.c.l.b16 %v272
        %v282 = vpack.c.b16 %v279, %v278
        %v283 = vpack.c.b16 %v281, %v280
        %vm286 = vcmask 261120
        %v288 = vsel %vm286, %v267, 0
        %290 = vmatpush.bf16.msra.mxu0 0
        %291 = vmatpush.bf16.msra.mxu0 0
        %292 = vmatpush.bf16.msra.mxu0 0
        %293 = vmatpush.bf16.msra.mxu0 0
        %294 = vmatpush.bf16.msra.mxu0 0
        %295 = vmatpush.bf16.msra.mxu0 0
        %296 = vmatpush.bf16.msra.mxu0 %v283
        %297 = vmatpush.bf16.msra.mxu0 %v282
        %298 = vmatmul.bf16.gmra.mxu0 %v288
        %v299 = vpop.f32.mrf.mxu0
        %v300 = vadd.f32 %v273, %v299
        %v301 = vpop.f32.mrf.mxu0
        %302 = vdwg.mxu0
        %v303 = vperm.slane %v268, 1
        %v304 = vmul.f32 %v300, %v303
        %v305 = vperm.slane %v268, 2
        %v306 = vadd.f32 %v304, %v305
        %v307 = vmax.f32 %v306, 0.0
        %v308 = vadd.f32 %v300, %v307
        %v309 = vmax.f32 %v308, 0.0
        %v310 = vpack.c.bf16 %v309, %v309
        %v311 = vld [vmem:[#allocation7] sm:$0xff]
        %v312 = vld [vmem:[#allocation7 + $0x8] sm:$0xff]
        %v313 = vld [vmem:[#allocation7 + $0x10] sm:$0xff]
        %v314 = vld [vmem:[#allocation7 + $0x18] sm:$0xff]
        %v315 = vld [vmem:[#allocation7 + $0x20] sm:$0xff]
        %v316 = vld [vmem:[#allocation7 + $0x28] sm:$0xff]
        %v317 = vld [vmem:[#allocation7 + $0x30] sm:$0xff]
        %v318 = vld [vmem:[#allocation7 + $0x38] sm:$0xff]
        %v327 = vunpack.c.l.b16 %v311
        %v328 = vunpack.c.h.b16 %v311
        %v329 = vunpack.c.l.b16 %v312
        %v330 = vunpack.c.h.b16 %v312
        %v331 = vunpack.c.l.b16 %v313
        %v332 = vunpack.c.h.b16 %v313
        %v333 = vunpack.c.l.b16 %v314
        %v334 = vunpack.c.h.b16 %v314
        %v335 = vunpack.c.l.b16 %v315
        %v336 = vunpack.c.h.b16 %v315
        %v337 = vunpack.c.l.b16 %v316
        %v338 = vunpack.c.h.b16 %v316
        %v339 = vunpack.c.l.b16 %v317
        %v340 = vunpack.c.h.b16 %v317
        %v341 = vunpack.c.l.b16 %v318
        %v342 = vunpack.c.h.b16 %v318
        %v343 = vpack.c.b16 %v329, %v327
        %v344 = vpack.c.b16 %v330, %v328
        %v345 = vpack.c.b16 %v333, %v331
        %v346 = vpack.c.b16 %v334, %v332
        %v347 = vpack.c.b16 %v337, %v335
        %v348 = vpack.c.b16 %v338, %v336
        %v349 = vpack.c.b16 %v341, %v339
        %v350 = vpack.c.b16 %v342, %v340
        %vm359 = vcmask 523264
        %v361 = vsel %vm359, %v310, 0
        %363 = vmatpush.bf16.msra.mxu0 0
        %364 = vmatpush.bf16.msra.mxu0 0
        %365 = vmatpush.bf16.msra.mxu0 0
        %366 = vmatpush.bf16.msra.mxu0 0
        %367 = vmatpush.bf16.msra.mxu0 %v349
        %368 = vmatpush.bf16.msra.mxu0 %v347
        %369 = vmatpush.bf16.msra.mxu0 %v345
        %370 = vmatpush.bf16.msra.mxu0 %v343
        %371 = vmatmul.bf16.gmra.mxu0 %v361
        %v372 = vpop.f32.mrf.mxu0
        %v373 = vadd.f32 0.0, %v372
        %v374 = vpop.f32.mrf.mxu0
        %375 = vdwg.mxu0
        %376 = vmatpush.bf16.msra.mxu0 0
        %377 = vmatpush.bf16.msra.mxu0 0
        %378 = vmatpush.bf16.msra.mxu0 0
        %379 = vmatpush.bf16.msra.mxu0 0
        %380 = vmatpush.bf16.msra.mxu0 %v350
        %381 = vmatpush.bf16.msra.mxu0 %v348
        %382 = vmatpush.bf16.msra.mxu0 %v346
        %383 = vmatpush.bf16.msra.mxu0 %v344
        %384 = vmatmul.bf16.gmra.mxu0 %v361
        %v385 = vpop.f32.mrf.mxu0
        %v386 = vadd.f32 0.0, %v385
        %v387 = vpop.f32.mrf.mxu0
        %388 = vdwg.mxu0
        %v390 = vrot.slane %v268, 3
        %v392 = vadd.f32 %v373, %v390
        %v393 = vmax.f32 %v392, 0.0
        %394 = vst [vmem:[%s264] sm:$0x1] %v393
        %v396 = vrot.slane %v386, 7
        %v398 = vadd.f32 %v373, %v396
        %v399 = vperm.slane %v268, 3
        %v400 = vadd.f32 %v398, %v399
        %v401 = vmax.f32 %v400, 0.0
        %402 = vst [vmem:[%s264] sm:$0xfe] %v401
        %v403 = vrot.slane %v268, 4
        %v405 = vadd.f32 %v386, %v403
        %v406 = vmax.f32 %v405, 0.0
        %407 = vst [vmem:[%s264 + $0x1] sm:$0x80] %v406
        %v408 = vmax.f32 %v268, 0.0
        %409 = vst [vmem:[%s264 + $0x6] sm:$0x8] %v408
        %p410 = scmp.lt.s32.totalorder %s20, 1
        %s411 = scalar_select %p410, %s20, 1
        %s412 = smul.addr %s411, 2
        %s413 = smul.addr %s412, 8
        %s414 = scalar_lea.vmem %s4, %s413
        // Predicated region
        $region53: #{tpu_custom_call.1} parent=35 // pred_check
          %p415 = pneg %p127
        $region54: #{tpu_custom_call.1} parent=35 // pred_check_branch
          %417 = sbr.rel (%p415) target = $region56
        $region55: #{tpu_custom_call.1} parent=35 // pred_region
          _
        $region56: #{tpu_custom_call.1} parent=35 // pred_fallthru
          _
      $region36: #{tpu_custom_call.1} parent=5 // pred_fallthru
        _
      %p418 = scmp.le.s32.totalorder 2, %s15
      // Predicated region
      $region57: #{tpu_custom_call.1} parent=5 // pred_check
        %p419 = pneg %p418
      $region58: #{tpu_custom_call.1} parent=5 // pred_check_branch
        %421 = sbr.rel (%p419) target = $region60
      $region59: #{tpu_custom_call.1} parent=5 // pred_region
        %s422 = ssub.s32 %s15, 2
        // Predicated region
        $region61: #{tpu_custom_call.1} parent=59 // pred_check
          %p423 = pneg %p133
        $region62: #{tpu_custom_call.1} parent=59 // pred_check_branch
          %425 = sbr.rel (%p423) target = $region64
        $region63: #{tpu_custom_call.1} parent=59 // pred_region
          %p426 = scmp.lt.s32.totalorder %s21, 1
          %s427 = scalar_select %p426, %s21, 1
          %s428 = smul.addr %s427, 2
          %s429 = smul.addr %s428, 8
          %s430 = scalar_lea.vmem %s4, %s429
        $region64: #{tpu_custom_call.1} parent=59 // pred_fallthru
          _
      $region60: #{tpu_custom_call.1} parent=5 // pred_fallthru
        _
    $region6: #{tpu_custom_call.1} parent=1 // loop_footer
      %s19 = sadd.s32 1, %s15
    $region7: #{tpu_custom_call.1} parent=1 // loop_footer_branch
      %14 = sbr.rel target = $region3
    $region8: #{tpu_custom_call.1} parent=1 // loop_exit
      _
    %431 = vsyncpa [#allocation3], 1
    %s432 = scalar_lea.sflag [#allocation3], 1
    %433 = vsyncpa %s432, 1
    %434 = vsyncpa [#allocation5], 1
    %435 = vsyncpa [#allocation8], 1

</llo_original>
